<compile_context>
chip_gen: v7x
topology: tpu7x:2x2x1
jax: 0.10.0
libtpu: 0.0.40
codegen_flags: <defaults>
</compile_context>

<pallas_src>
import jax
import jax.numpy as jnp
from jax.experimental import pallas as pl
from jax.experimental.pallas import tpu as pltpu

_LANE = 128


def _affine_constant_flow_kernel(x_ref, es_ref, t_ref, z_ref):
    # Pure fused multiply-add on the VPU.  exp(s) is precomputed in the
    # wrapper (it is only a (1, D) parameter), so nothing is recomputed or
    # re-broadcast per grid step; the kernel is bound by HBM DMA.
    z_ref[...] = x_ref[...] * es_ref[...] + t_ref[...]


def _sublane_multiple(dtype):
    """Dtype-aware sublane rounding: 8 for f32, 16 for bf16, 32 for int8/fp8."""
    itemsize = jnp.dtype(dtype).itemsize
    return 8 * max(1, 4 // max(itemsize, 1))


def _target_block_bytes():
    """Generation-aware block-size target.

    v6e/v7x: 4 MiB blocks (double-buffered in+out ~= 16 MiB, fits the 32 MiB
    scoped VMEM default) to amortize the ~0.35 us/step grid overhead against
    1.4-3.2 TB/s HBM.  v5e (and unknown chips): cap at 2 MiB so ~4x block
    stays safely under the 16 MiB default scoped VMEM.
    """
    kind = ""
    try:
        kind = jax.devices()[0].device_kind.lower()
    except Exception:  # pragma: no cover - defensive; fall back to safe size.
        pass
    if "v6" in kind or "v7" in kind:
        return 4 << 20
    return 2 << 20


def _pick_row_tile(num_rows, row_bytes, sublane):
    """Largest row tile (multiple of `sublane`) whose block hits the target size,
    but never a single grid step when the batch is big enough to split across
    two TensorCores."""
    target = _target_block_bytes()
    tb = max(sublane, target // max(row_bytes, 1))
    tb = (tb // sublane) * sublane
    if tb >= num_rows:
        # Whole array fits one block: if possible, split into two tiles so the
        # "parallel" grid axis gives v7x's second TensorCore work to do.
        half = ((num_rows // 2) // sublane) * sublane
        if half >= sublane:
            return half
        return num_rows  # tiny input; block == full array is always legal
    return tb


def _affine_scale_shift(x2, es2, t2):
    """z2 = x2 * es2 + t2, tiled over the batch (row) axis only.

    The block's last dim equals the full feature dim, which is always a legal
    block shape, so no feature padding / slicing passes are ever needed.
    """
    rows, dp = x2.shape
    itemsize = jnp.dtype(x2.dtype).itemsize
    sublane = _sublane_multiple(x2.dtype)
    tb = _pick_row_tile(rows, dp * itemsize, sublane)
    grid = (pl.cdiv(rows, tb),)

    cost = pl.CostEstimate(
        flops=2 * rows * dp,
        transcendentals=0,
        bytes_accessed=int(2 * rows * dp * itemsize + 2 * dp * itemsize),
    )

    return pl.pallas_call(
        _affine_constant_flow_kernel,
        out_shape=jax.ShapeDtypeStruct((rows, dp), x2.dtype),
        grid=grid,
        in_specs=[
            pl.BlockSpec((tb, dp), lambda i: (i, 0)),   # x: tiled over batch rows
            pl.BlockSpec((1, dp), lambda i: (0, 0)),    # exp(s): same tiny block
            pl.BlockSpec((1, dp), lambda i: (0, 0)),    # t: same tiny block
        ],
        out_specs=pl.BlockSpec((tb, dp), lambda i: (i, 0)),
        compiler_params=pltpu.CompilerParams(
            # Row tiles are independent -> shard the batch loop across v7x's
            # two TensorCores; harmless no-op on single-core v5e/v6e.
            dimension_semantics=("parallel",),
        ),
        cost_estimate=cost,
    )(x2, es2, t2)


def affine_constant_flow_forward(x, s, t):
    """Pallas implementation of AffineConstantFlow.forward.

    Args:
      x: (B, D) input.
      s: (1, D) log-scale parameter.
      t: (1, D) shift parameter.
    Returns:
      z: (B, D) = x * exp(s) + t
      log_det: (1,) = sum(s, axis=1)  (accumulated in f32)
    """
    B, D = x.shape

    # Tiny parameter-only work hoisted out of the per-tile kernel path.
    log_det = jnp.sum(s.astype(jnp.float32), axis=1)            # keep f32 parity
    es = jnp.exp(s.astype(jnp.float32)).astype(x.dtype)          # (1, D)
    tt = t.astype(x.dtype)                                       # (1, D)

    if D % _LANE == 0:
        # Already lane-dense: just tile the batch axis.
        return _affine_scale_shift(x, es, tt), log_det

    if D < _LANE and _LANE % D == 0:
        # Lane-dense fold: pack `fold` consecutive samples into one 128-lane
        # row -> unmasked full-width vector stores, zero wasted lanes.
        fold = _LANE // D
        rem = B % fold
        if rem != 0:
            # Pad a handful of batch rows (cheap) rather than padding the
            # feature axis to 128 (which would inflate HBM traffic by 128/D).
            x_in = jnp.pad(x, ((0, fold - rem), (0, 0)))
        else:
            x_in = x
        bp = x_in.shape[0]
        x2 = x_in.reshape(bp // fold, _LANE)
        es2 = jnp.tile(es, (1, fold))
        t2 = jnp.tile(tt, (1, fold))
        z = _affine_scale_shift(x2, es2, t2).reshape(bp, D)
        if rem != 0:
            z = z[:B]
        return z, log_det

    # Generic D: tile only the batch axis; the block's last dim is the full
    # feature dim (legal block shape).  Partial-lane stores on the D tail are
    # far cheaper than extra full-tensor pad/slice HBM passes.
    return _affine_scale_shift(x, es, tt), log_det


def reference_forward(x, s, t):
    z = x * jnp.exp(s) + t
    log_det = jnp.sum(s.astype(jnp.float32), axis=1)
    return z, log_det


if __name__ == "__main__":
    key = jax.random.PRNGKey(0)

    # Exercise all layout paths at small shapes consistent with the module:
    #   (8, 32)  -> lane-dense fold (B % fold == 0)
    #   (7, 32)  -> lane-dense fold with batch padding (B % fold != 0)
    #   (64, 256)-> lane-aligned direct tiling
    #   (16, 200)-> generic-D path (full-D block, no pad/slice passes)
    test_shapes = [(8, 32), (7, 32), (64, 256), (16, 200)]

    for batch, dim in test_shapes:
        k_x, k_s, k_t, key = jax.random.split(key, 4)
        x = jax.random.normal(k_x, (batch, dim), dtype=jnp.float32)
        s = jax.random.normal(k_s, (1, dim), dtype=jnp.float32)   # torch.randn(1, dim)
        t = jax.random.normal(k_t, (1, dim), dtype=jnp.float32)

        z, log_det = affine_constant_flow_forward(x, s, t)
        jax.block_until_ready((z, log_det))

        z_ref, log_det_ref = reference_forward(x, s, t)
        assert z.shape == (batch, dim) and log_det.shape == (1,)
        assert jnp.allclose(z, z_ref, atol=1e-5, rtol=1e-5)
        assert jnp.allclose(log_det, log_det_ref, atol=1e-5, rtol=1e-5)

    print("KERNEL_OK")
</pallas_src>

<mosaic_0001>
module attributes {stable_mosaic.version = 11 : i64} {
  func.func @_affine_constant_flow_kernel(%arg0: i32, %arg1: memref<2x128xf32, #tpu.memory_space<vmem>>, %arg2: memref<1x128xf32, #tpu.memory_space<vmem>>, %arg3: memref<1x128xf32, #tpu.memory_space<vmem>>, %arg4: memref<2x128xf32, #tpu.memory_space<vmem>>) attributes {dimension_semantics = [#tpu.dimension_semantics<parallel>], iteration_bounds = array<i64: 1>, scalar_prefetch = 0 : i64, scratch_operands = 0 : i64, tpu.core_type = #tpu.core_type<tc>, window_params = [{transform_indices = @transform_0, window_bounds = array<i64: 2, 128>}, {pipeline_mode = #tpu.pipeline_mode<synchronous>, transform_indices = @transform_1, window_bounds = array<i64: 1, 128>}, {pipeline_mode = #tpu.pipeline_mode<synchronous>, transform_indices = @transform_2, window_bounds = array<i64: 1, 128>}, {transform_indices = @transform_3, window_bounds = array<i64: 2, 128>}]} {
    %c0 = arith.constant 0 : index
    %c0_0 = arith.constant 0 : index
    %0 = vector.load %arg1[%c0, %c0_0] : memref<2x128xf32, #tpu.memory_space<vmem>>, vector<2x128xf32>
    %c0_1 = arith.constant 0 : index
    %c0_2 = arith.constant 0 : index
    %1 = vector.load %arg2[%c0_1, %c0_2] : memref<1x128xf32, #tpu.memory_space<vmem>>, vector<1x128xf32>
    %2 = vector.broadcast %1 : vector<1x128xf32> to vector<2x128xf32>
    %3 = arith.mulf %0, %2 : vector<2x128xf32>
    %c0_3 = arith.constant 0 : index
    %c0_4 = arith.constant 0 : index
    %4 = vector.load %arg3[%c0_3, %c0_4] : memref<1x128xf32, #tpu.memory_space<vmem>>, vector<1x128xf32>
    %5 = vector.broadcast %4 : vector<1x128xf32> to vector<2x128xf32>
    %6 = arith.addf %3, %5 : vector<2x128xf32>
    %c0_5 = arith.constant 0 : index
    %c0_6 = arith.constant 0 : index
    %7 = vector.load %arg4[%c0_5, %c0_6] : memref<2x128xf32, #tpu.memory_space<vmem>>, vector<2x128xf32>
    tpu.vector_store %arg4[%c0_5, %c0_6], %6 {strides = array<i32>} : memref<2x128xf32, #tpu.memory_space<vmem>>, vector<2x128xf32>,
    return
  }
  func.func @transform_0(%arg0: i32) -> (i32, i32) {
    %c0_i32 = arith.constant 0 : i32
    %c0_i32_0 = arith.constant 0 : i32
    return %arg0, %c0_i32 : i32, i32
  }
  func.func @transform_1(%arg0: i32) -> (i32, i32) {
    %c0_i32 = arith.constant 0 : i32
    %c0_i32_0 = arith.constant 0 : i32
    %c0_i32_1 = arith.constant 0 : i32
    return %c0_i32, %c0_i32_0 : i32, i32
  }
  func.func @transform_2(%arg0: i32) -> (i32, i32) {
    %c0_i32 = arith.constant 0 : i32
    %c0_i32_0 = arith.constant 0 : i32
    %c0_i32_1 = arith.constant 0 : i32
    return %c0_i32, %c0_i32_0 : i32, i32
  }
  func.func @transform_3(%arg0: i32) -> (i32, i32) {
    %c0_i32 = arith.constant 0 : i32
    %c0_i32_0 = arith.constant 0 : i32
    return %arg0, %c0_i32 : i32, i32
  }
}

</mosaic_0001>

<llo_original>
// kernel: tpu_custom_call.1
$region0: #{tpu_custom_call.1}
  #allocation0 [shape = 'u32[]', space=smem, size = 0x4, offset = 0x4, fixed_abs, tag = 'smem constant byte address 0x4 - core index']
  #allocation1 [shape = 'u32[144,128]{1,0:T(1,128)}', space=vmem, size = 0x12000, scoped, tag = 'internal scratch']
  %s0 = inlined_call_operand.hbm [shape: f32[2,128], index: 0, kind: input, shape index: {}]
  %s1 = inlined_call_operand.vmem [shape: f32[1,128], index: 1, kind: input, shape index: {}]
  %s2 = inlined_call_operand.vmem [shape: f32[1,128], index: 2, kind: input, shape index: {}]
  %s3 = inlined_call_operand.hbm [shape: f32[2,128], index: 3, kind: output, shape index: {}]
  %s4 = sld [smem:[#allocation0]]
  $region26: #{tpu_custom_call.1} parent=0
    _
  %s6 = ssub.s32 1, %s4
  %s7 = scalar_select 0, %s6, %s4
  $region1: #{tpu_custom_call.1} parent=0
    #allocation2 [shape = 'u8[1024]{0}', space=vmem, size = 0x400, scoped, tag = 'input window, operand 0, single buffered']
    #allocation3 [shape = 's32[1]{0}', space=sflag, size = 0x4, scoped, tag = 'scoped memory for tpu_custom_call.1']
    #allocation4 [shape = 's32[1]{0}', space=sflag, size = 0x4, scoped, tag = 'scoped memory for tpu_custom_call.1']
    #allocation5 [shape = 'u8[1024]{0}', space=vmem, size = 0x400, scoped, tag = 'output window, operand 0, single buffered']
    %8 = vsyncpa [#allocation3], 0
    %9 = vsyncpa [#allocation4], 0
    // Predicated region
    $region2: #{tpu_custom_call.1} parent=1 // pred_check
      _
    $region3: #{tpu_custom_call.1} parent=1 // pred_check_branch
      %11 = sbr.rel (0) target = $region5
    $region4: #{tpu_custom_call.1} parent=1 // pred_region
      %s13 = ssub.s32 32, 32
      %14 = vsyncadd [#allocation3], %s13
      %s16 = sshll.u32 [#allocation2], 4
      %s17 = int_to_ptr.vmem [resolvable:$true] %s16
      %19 = dma.hbm_to_vmem [thread:$0]  %s0, 32, %s17, [#allocation3]
    $region5: #{tpu_custom_call.1} parent=1 // pred_fallthru
      _
    // Predicated region
    $region6: #{tpu_custom_call.1} parent=1 // pred_check
      _
    $region7: #{tpu_custom_call.1} parent=1 // pred_check_branch
      %21 = sbr.rel (0) target = $region9
    $region8: #{tpu_custom_call.1} parent=1 // pred_region
      _
    $region9: #{tpu_custom_call.1} parent=1 // pred_fallthru
      _
    // Predicated region
    $region10: #{tpu_custom_call.1} parent=1 // pred_check
      _
    $region11: #{tpu_custom_call.1} parent=1 // pred_check_branch
      %23 = sbr.rel (0) target = $region13
    $region12: #{tpu_custom_call.1} parent=1 // pred_region
      _
    $region13: #{tpu_custom_call.1} parent=1 // pred_fallthru
      _
    // Predicated region
    $region14: #{tpu_custom_call.1} parent=1 // pred_check
      _
    $region15: #{tpu_custom_call.1} parent=1 // pred_check_branch
      %25 = sbr.rel (0) target = $region17
    $region16: #{tpu_custom_call.1} parent=1 // pred_region
      %26 = dma.done [#allocation3], 32
    $region17: #{tpu_custom_call.1} parent=1 // pred_fallthru
      _
    %v27 = vld [vmem:[#allocation2] sm:$0x3]
    %v28 = vld [vmem:[%s1] sm:$0x1]
    %v30 = vlaneseq
    %v31 = vshrl.u32 %v30, 7
    %v32 = vsub.s32 0, %v31
    %v33 = vrot.slane %v28, %v32
    %v35 = vmul.f32 %v27, %v33
    %v36 = vld [vmem:[%s2] sm:$0x1]
    %v38 = vlaneseq
    %v39 = vshrl.u32 %v38, 7
    %v40 = vsub.s32 0, %v39
    %v41 = vrot.slane %v36, %v40
    %v43 = vadd.f32 %v35, %v41
    %44 = vst [vmem:[#allocation5] sm:$0x3] %v43
    // Predicated region
    $region18: #{tpu_custom_call.1} parent=1 // pred_check
      _
    $region19: #{tpu_custom_call.1} parent=1 // pred_check_branch
      %46 = sbr.rel (0) target = $region21
    $region20: #{tpu_custom_call.1} parent=1 // pred_region
      %s48 = ssub.s32 32, 32
      %49 = vsyncadd [#allocation4], %s48
      %s51 = sshll.u32 [#allocation5], 4
      %s52 = int_to_ptr.vmem [resolvable:$true] %s51
      %54 = dma.vmem_to_hbm [thread:$0]  %s52, 32, %s3, [#allocation4]
    $region21: #{tpu_custom_call.1} parent=1 // pred_fallthru
      _
    // Predicated region
    $region22: #{tpu_custom_call.1} parent=1 // pred_check
      _
    $region23: #{tpu_custom_call.1} parent=1 // pred_check_branch
      %56 = sbr.rel (0) target = $region25
    $region24: #{tpu_custom_call.1} parent=1 // pred_region
      %57 = dma.done [#allocation4], 32
    $region25: #{tpu_custom_call.1} parent=1 // pred_fallthru
      _
    %58 = vsyncpa [#allocation3], 1
    %59 = vsyncpa [#allocation4], 1

</llo_original>
